<compile_context>
chip_gen: v7x
topology: tpu7x:2x2x1
jax: 0.10.0
libtpu: 0.0.40
codegen_flags: <defaults>
</compile_context>

<pallas_src>
import math

import jax
import jax.numpy as jnp
from jax.experimental import pallas as pl
from jax.experimental.pallas import tpu as pltpu


def _value_kernel(x_ref, w1_ref, b1_ref, w2_ref, b2_ref, wv_ref, bv_ref, o_ref):
    w1 = w1_ref[...]
    w2 = w2_ref[...]

    # Cast activations to the weight dtype (bf16 fast path if enabled) and
    # accumulate every dot in f32 on the MXU.
    x = x_ref[...].astype(w1.dtype)
    h1 = jnp.dot(x, w1, preferred_element_type=jnp.float32) + b1_ref[...]
    h1 = jnp.maximum(h1, 0.0)

    h2 = jnp.dot(h1.astype(w2.dtype), w2, preferred_element_type=jnp.float32) + b2_ref[...]
    h2 = jnp.maximum(h2, 0.0)

    # N=1 head: VPU multiply + XLU lane reduce (avoids a lane-sparse MXU pass).
    # Result is written lane-dense as a (1, tile_b) row -> unmasked stores.
    v = jnp.sum(h2 * wv_ref[...], axis=-1) + bv_ref[0, 0]
    o_ref[...] = v[None, :]


def _pick_tile_b(batch):
    """Few, large grid steps: per-step pipeline overhead (~0.35 us) dwarfs this
    tiny network's per-row compute, so use 1 step for small batches and a
    handful of big, evenly sized, 256-aligned steps for large batches."""
    if batch <= 1024:
        return batch                       # single step; full-dim block is always legal
    half = -(-batch // 2)                  # ceil(B/2): >=2 steps so v7x's 2 TCs both get work
    tile = ((half + 255) // 256) * 256     # 256-aligned (MXU M on v6e/v7x; 2x128 on v5e)
    return min(tile, 4096)                 # cap: h1+h2 f32 intermediates stay ~8 MiB (v7x VMEM)


def value_network_forward(state, params):
    """state: (B, input_dims) f32. params: dict (see init). Returns (B, 1) f32."""
    w1, b1, w2, b2, wv, bv = (
        params["w1"], params["b1"], params["w2"], params["b2"], params["wv"], params["bv"]
    )
    B, D = state.shape
    F1 = w1.shape[1]
    F2 = w2.shape[1]

    tile_b = _pick_tile_b(B)
    num_tiles = pl.cdiv(B, tile_b)         # no jnp.pad: partial last tile handled by Pallas
    total = num_tiles * tile_b

    const = lambda i: (0, 0)               # weights: same block every step -> VMEM-resident

    w_bytes = jnp.dtype(w1.dtype).itemsize
    cost = pl.CostEstimate(
        flops=2 * B * (D * F1 + F1 * F2 + F2),
        transcendentals=0,
        bytes_accessed=(
            B * D * 4                       # state
            + D * F1 * w_bytes + F1 * 4     # w1, b1
            + F1 * F2 * w_bytes + F2 * 4    # w2, b2
            + F2 * 4 + 4                    # wv, bv
            + total * 4                     # out
        ),
    )

    # Explicit scoped-VMEM budget: live-bytes estimate x2 headroom, floored at
    # the 32 MiB default and capped under v7x's 64 MiB physical VMEM.
    est_vmem = (
        2 * tile_b * D * 4                  # state tile (double-buffered)
        + 2 * (D * F1 + F1 * F2) * w_bytes  # w1, w2 (resident, double-buffered)
        + 2 * (F1 + 2 * F2) * 4             # b1, b2, wv
        + tile_b * (F1 + F2) * 4            # h1 / h2 f32 intermediates
        + 2 * tile_b * 4                    # output row (double-buffered)
    )
    vmem_limit = int(min(max(2 * est_vmem, 32 * 1024 * 1024), 48 * 1024 * 1024))

    out = pl.pallas_call(
        _value_kernel,
        out_shape=jax.ShapeDtypeStruct((1, total), jnp.float32),
        grid=(num_tiles,),
        in_specs=[
            pl.BlockSpec((tile_b, D), lambda i: (i, 0)),        # state tile (pipelined)
            pl.BlockSpec((D, F1), const),                       # w1 (resident)
            pl.BlockSpec((1, F1), const),                       # b1
            pl.BlockSpec((F1, F2), const),                      # w2 (resident)
            pl.BlockSpec((1, F2), const),                       # b2
            pl.BlockSpec((1, F2), const),                       # wv row
            pl.BlockSpec(memory_space=pltpu.MemorySpace.SMEM),  # bv scalar in SMEM
        ],
        out_specs=pl.BlockSpec((1, tile_b), lambda i: (0, i)),  # lane-dense output row
        compiler_params=pltpu.CompilerParams(
            dimension_semantics=("parallel",),                  # shards grid on v7x's 2 TCs
            vmem_limit_bytes=vmem_limit,
        ),
        cost_estimate=cost,
    )(state, w1, b1, w2, b2, wv, bv)

    v = out.reshape(-1)
    if total != B:
        v = v[:B]                           # discard garbage rows of the partial last tile
    return v.reshape(B, 1)


def init_value_network_params(key, input_dims, fc1_dims=256, fc2_dims=256,
                              weight_dtype=jnp.float32):
    """PyTorch nn.Linear-style init (U[-1/sqrt(fan_in), 1/sqrt(fan_in)]).

    Default weight_dtype=float32 matches the PyTorch ValueNetwork exactly.
    Pass weight_dtype=jnp.bfloat16 as an explicit opt-in for MXU throughput
    (halved weight DMA, ~1e-2-scale quantization error).
    """
    ks = jax.random.split(key, 6)

    def linear_w(k, fan_in, fan_out):
        bound = 1.0 / math.sqrt(fan_in)
        return jax.random.uniform(k, (fan_in, fan_out), jnp.float32, -bound, bound)

    def linear_b(k, fan_in, fan_out):
        bound = 1.0 / math.sqrt(fan_in)
        return jax.random.uniform(k, (1, fan_out), jnp.float32, -bound, bound)

    w1 = linear_w(ks[0], input_dims, fc1_dims).astype(weight_dtype)
    b1 = linear_b(ks[1], input_dims, fc1_dims)
    w2 = linear_w(ks[2], fc1_dims, fc2_dims).astype(weight_dtype)
    b2 = linear_b(ks[3], fc1_dims, fc2_dims)
    # Value head stored as a (1, fc2) row (used as a VPU reduce, not an MXU dot).
    wv = linear_w(ks[4], fc2_dims, 1).T.astype(jnp.float32)
    bv = linear_b(ks[5], fc2_dims, 1)
    return {"w1": w1, "b1": b1, "w2": w2, "b2": b2, "wv": wv, "bv": bv}


def _reference_forward(state, params):
    """Pure-JAX reference with the same precision policy as the kernel."""
    w1, w2 = params["w1"], params["w2"]
    h1 = jnp.dot(state.astype(w1.dtype), w1, preferred_element_type=jnp.float32) + params["b1"]
    h1 = jnp.maximum(h1, 0.0)
    h2 = jnp.dot(h1.astype(w2.dtype), w2, preferred_element_type=jnp.float32) + params["b2"]
    h2 = jnp.maximum(h2, 0.0)
    return jnp.sum(h2 * params["wv"], axis=-1, keepdims=True) + params["bv"]


if __name__ == "__main__":
    key = jax.random.PRNGKey(0)
    k_params, k_state = jax.random.split(key)

    batch = 8
    input_dims = 16
    fc1_dims = 256
    fc2_dims = 256

    params = init_value_network_params(k_params, input_dims, fc1_dims, fc2_dims)
    state = jax.random.normal(k_state, (batch, input_dims), dtype=jnp.float32)

    v = value_network_forward(state, params)
    v = jax.block_until_ready(v)

    v_ref = _reference_forward(state, params)
    assert v.shape == (batch, 1), v.shape
    assert jnp.allclose(v, v_ref, atol=1e-3, rtol=1e-3), (v, v_ref)

    print("KERNEL_OK")
</pallas_src>

<mosaic_0001>
module attributes {stable_mosaic.version = 11 : i64} {
  func.func @_value_kernel(%arg0: i32, %arg1: memref<8x16xf32, #tpu.memory_space<vmem>>, %arg2: memref<16x256xf32, #tpu.memory_space<vmem>>, %arg3: memref<1x256xf32, #tpu.memory_space<vmem>>, %arg4: memref<256x256xf32, #tpu.memory_space<vmem>>, %arg5: memref<1x256xf32, #tpu.memory_space<vmem>>, %arg6: memref<1x256xf32, #tpu.memory_space<vmem>>, %arg7: memref<1x1xf32, #tpu.memory_space<smem>>, %arg8: memref<1x8xf32, #tpu.memory_space<vmem>>) attributes {dimension_semantics = [#tpu.dimension_semantics<parallel>], iteration_bounds = array<i64: 1>, scalar_prefetch = 0 : i64, scratch_operands = 0 : i64, tpu.core_type = #tpu.core_type<tc>, window_params = [{transform_indices = @transform_0, window_bounds = array<i64: 8, 16>}, {pipeline_mode = #tpu.pipeline_mode<synchronous>, transform_indices = @transform_1, window_bounds = array<i64: 16, 256>}, {pipeline_mode = #tpu.pipeline_mode<synchronous>, transform_indices = @transform_2, window_bounds = array<i64: 1, 256>}, {pipeline_mode = #tpu.pipeline_mode<synchronous>, transform_indices = @transform_3, window_bounds = array<i64: 256, 256>}, {pipeline_mode = #tpu.pipeline_mode<synchronous>, transform_indices = @transform_4, window_bounds = array<i64: 1, 256>}, {pipeline_mode = #tpu.pipeline_mode<synchronous>, transform_indices = @transform_5, window_bounds = array<i64: 1, 256>}, {transform_indices = @transform_6, window_bounds = array<i64: 1, 1>}, {transform_indices = @transform_7, window_bounds = array<i64: 1, 8>}]} {
    %c0 = arith.constant 0 : index
    %c0_0 = arith.constant 0 : index
    %0 = vector.load %arg2[%c0, %c0_0] : memref<16x256xf32, #tpu.memory_space<vmem>>, vector<16x256xf32>
    %c0_1 = arith.constant 0 : index
    %c0_2 = arith.constant 0 : index
    %1 = vector.load %arg4[%c0_1, %c0_2] : memref<256x256xf32, #tpu.memory_space<vmem>>, vector<256x256xf32>
    %c0_3 = arith.constant 0 : index
    %c0_4 = arith.constant 0 : index
    %2 = vector.load %arg1[%c0_3, %c0_4] : memref<8x16xf32, #tpu.memory_space<vmem>>, vector<8x16xf32>
    %cst = arith.constant dense<0.000000e+00> : vector<8x256xf32>
    %3 = tpu.matmul %2, %0, %cst {dimension_numbers = #tpu.dot_dimension_numbers<[1], [0], [0], [1], [0, 0, 1, 1], [], []>} : vector<8x16xf32>, vector<16x256xf32>, vector<8x256xf32> -> vector<8x256xf32>
    %c0_5 = arith.constant 0 : index
    %c0_6 = arith.constant 0 : index
    %4 = vector.load %arg3[%c0_5, %c0_6] : memref<1x256xf32, #tpu.memory_space<vmem>>, vector<1x256xf32>
    %5 = vector.broadcast %4 : vector<1x256xf32> to vector<8x256xf32>
    %6 = arith.addf %3, %5 : vector<8x256xf32>
    %cst_7 = arith.constant 0.000000e+00 : f32
    %7 = vector.broadcast %cst_7 : f32 to vector<8x256xf32>
    %8 = arith.maximumf %6, %7 : vector<8x256xf32>
    %cst_8 = arith.constant dense<0.000000e+00> : vector<8x256xf32>
    %9 = tpu.matmul %8, %1, %cst_8 {dimension_numbers = #tpu.dot_dimension_numbers<[1], [0], [0], [1], [0, 0, 1, 1], [], []>} : vector<8x256xf32>, vector<256x256xf32>, vector<8x256xf32> -> vector<8x256xf32>
    %c0_9 = arith.constant 0 : index
    %c0_10 = arith.constant 0 : index
    %10 = vector.load %arg5[%c0_9, %c0_10] : memref<1x256xf32, #tpu.memory_space<vmem>>, vector<1x256xf32>
    %11 = vector.broadcast %10 : vector<1x256xf32> to vector<8x256xf32>
    %12 = arith.addf %9, %11 : vector<8x256xf32>
    %cst_11 = arith.constant 0.000000e+00 : f32
    %13 = vector.broadcast %cst_11 : f32 to vector<8x256xf32>
    %14 = arith.maximumf %12, %13 : vector<8x256xf32>
    %c0_12 = arith.constant 0 : index
    %c0_13 = arith.constant 0 : index
    %15 = vector.load %arg6[%c0_12, %c0_13] : memref<1x256xf32, #tpu.memory_space<vmem>>, vector<1x256xf32>
    %16 = vector.broadcast %15 : vector<1x256xf32> to vector<8x256xf32>
    %17 = arith.mulf %14, %16 : vector<8x256xf32>
    %cst_14 = arith.constant dense<0.000000e+00> : vector<8xf32>
    %18 = vector.multi_reduction <add>, %17, %cst_14 [1] : vector<8x256xf32> to vector<8xf32>
    %c0_15 = arith.constant 0 : index
    %c0_16 = arith.constant 0 : index
    %19 = memref.load %arg7[%c0_15, %c0_16] : memref<1x1xf32, #tpu.memory_space<smem>>
    %20 = vector.broadcast %19 : f32 to vector<8xf32>
    %21 = arith.addf %18, %20 : vector<8xf32>
    %22 = vector.shape_cast %21 : vector<8xf32> to vector<1x8xf32>
    %c0_17 = arith.constant 0 : index
    %c0_18 = arith.constant 0 : index
    %23 = vector.load %arg8[%c0_17, %c0_18] : memref<1x8xf32, #tpu.memory_space<vmem>>, vector<1x8xf32>
    tpu.vector_store %arg8[%c0_17, %c0_18], %22 {strides = array<i32>} : memref<1x8xf32, #tpu.memory_space<vmem>>, vector<1x8xf32>,
    return
  }
  func.func @transform_0(%arg0: i32) -> (i32, i32) {
    %c0_i32 = arith.constant 0 : i32
    %c0_i32_0 = arith.constant 0 : i32
    return %arg0, %c0_i32 : i32, i32
  }
  func.func @transform_1(%arg0: i32) -> (i32, i32) {
    %c0_i32 = arith.constant 0 : i32
    %c0_i32_0 = arith.constant 0 : i32
    %c0_i32_1 = arith.constant 0 : i32
    return %c0_i32, %c0_i32_0 : i32, i32
  }
  func.func @transform_2(%arg0: i32) -> (i32, i32) {
    %c0_i32 = arith.constant 0 : i32
    %c0_i32_0 = arith.constant 0 : i32
    %c0_i32_1 = arith.constant 0 : i32
    return %c0_i32, %c0_i32_0 : i32, i32
  }
  func.func @transform_3(%arg0: i32) -> (i32, i32) {
    %c0_i32 = arith.constant 0 : i32
    %c0_i32_0 = arith.constant 0 : i32
    %c0_i32_1 = arith.constant 0 : i32
    return %c0_i32, %c0_i32_0 : i32, i32
  }
  func.func @transform_4(%arg0: i32) -> (i32, i32) {
    %c0_i32 = arith.constant 0 : i32
    %c0_i32_0 = arith.constant 0 : i32
    %c0_i32_1 = arith.constant 0 : i32
    return %c0_i32, %c0_i32_0 : i32, i32
  }
  func.func @transform_5(%arg0: i32) -> (i32, i32) {
    %c0_i32 = arith.constant 0 : i32
    %c0_i32_0 = arith.constant 0 : i32
    %c0_i32_1 = arith.constant 0 : i32
    return %c0_i32, %c0_i32_0 : i32, i32
  }
  func.func @transform_6(%arg0: i32) -> (i32, i32) {
    %c0_i32 = arith.constant 0 : i32
    %c0_i32_0 = arith.constant 0 : i32
    %c0_i32_1 = arith.constant 0 : i32
    return %c0_i32, %c0_i32_0 : i32, i32
  }
  func.func @transform_7(%arg0: i32) -> (i32, i32) {
    %c0_i32 = arith.constant 0 : i32
    %c0_i32_0 = arith.constant 0 : i32
    return %c0_i32, %arg0 : i32, i32
  }
}

</mosaic_0001>

<llo_original>
// kernel: tpu_custom_call.1
$region0: #{tpu_custom_call.1}
  #allocation0 [shape = 'u32[]', space=smem, size = 0x4, offset = 0x4, fixed_abs, tag = 'smem constant byte address 0x4 - core index']
  #allocation1 [shape = 'u32[144,128]{1,0:T(1,128)}', space=vmem, size = 0x12000, scoped, tag = 'internal scratch']
  #allocation2 [shape = 'f32[1,1]{1,0:T(1,128)S(6)}', space=smem, size = 0x200, scoped, tag = 'scoped memory for tpu_custom_call.1']
  %s0 = inlined_call_operand.hbm [shape: f32[8,16], index: 0, kind: input, shape index: {}]
  %s1 = inlined_call_operand.hbm [shape: f32[16,256], index: 1, kind: input, shape index: {}]
  %s2 = inlined_call_operand.vmem [shape: f32[1,256], index: 2, kind: input, shape index: {}]
  %s3 = inlined_call_operand.hbm [shape: f32[256,256], index: 3, kind: input, shape index: {}]
  %s4 = inlined_call_operand.vmem [shape: f32[1,256], index: 4, kind: input, shape index: {}]
  %s5 = inlined_call_operand.vmem [shape: f32[1,256], index: 5, kind: input, shape index: {}]
  %s6 = inlined_call_operand.<no memory space> [shape: f32[1,1], index: 6, kind: input, shape index: {}]
  %s7 = inlined_call_operand.hbm [shape: f32[1,8], index: 7, kind: output, shape index: {}]
  %s8 = sld [smem:[#allocation0]]
  $region50: #{tpu_custom_call.1} parent=0
    _
  %s10 = ssub.s32 1, %s8
  %s11 = scalar_select 0, %s10, %s8
  %12 = sst [smem:[#allocation2]] %s6
  $region1: #{tpu_custom_call.1} parent=0
    #allocation3 [shape = 'u8[4096]{0}', space=vmem, size = 0x1000, scoped, tag = 'input window, operand 0, single buffered']
    #allocation4 [shape = 's32[1]{0}', space=sflag, size = 0x4, scoped, tag = 'scoped memory for tpu_custom_call.1']
    #allocation5 [shape = 's32[1]{0}', space=sflag, size = 0x4, scoped, tag = 'scoped memory for tpu_custom_call.1']
    #allocation6 [shape = 'u8[16384]{0}', space=vmem, size = 0x4000, scoped, tag = 'input window, operand 1, single buffered']
    #allocation7 [shape = 's32[1]{0}', space=sflag, size = 0x4, scoped, tag = 'scoped memory for tpu_custom_call.1']
    #allocation8 [shape = 'u8[262144]{0}', space=vmem, size = 0x40000, scoped, tag = 'input window, operand 3, single buffered']
    #allocation9 [shape = 'u8[512]{0}', space=vmem, size = 0x400, scoped, tag = 'output window, operand 0, single buffered']
    %13 = vsyncpa [#allocation4], 0
    %14 = vsyncpa [#allocation7], 0
    %15 = vsyncpa [#allocation5], 0
    // Predicated region
    $region2: #{tpu_custom_call.1} parent=1 // pred_check
      _
    $region3: #{tpu_custom_call.1} parent=1 // pred_check_branch
      %17 = sbr.rel (0) target = $region5
    $region4: #{tpu_custom_call.1} parent=1 // pred_region
      %s19 = ssub.s32 128, 128
      %20 = vsyncadd [#allocation4], %s19
      %s22 = sshll.u32 [#allocation3], 4
      %s23 = int_to_ptr.vmem [resolvable:$true] %s22
      %25 = dma.hbm_to_vmem [thread:$0]  %s0, 128, %s23, [#allocation4]
    $region5: #{tpu_custom_call.1} parent=1 // pred_fallthru
      _
    // Predicated region
    $region6: #{tpu_custom_call.1} parent=1 // pred_check
      _
    $region7: #{tpu_custom_call.1} parent=1 // pred_check_branch
      %27 = sbr.rel (0) target = $region9
    $region8: #{tpu_custom_call.1} parent=1 // pred_region
      %s29 = ssub.s32 512, 512
      %30 = vsyncadd [#allocation7], %s29
      %s31 = sshll.u32 [#allocation6], 4
      %s32 = int_to_ptr.vmem [resolvable:$true] %s31
      %37 = dma.hbm_to_vmem [thread:$0]  %s1, 512, %s32, [#allocation7], 256, 256, 16
    $region9: #{tpu_custom_call.1} parent=1 // pred_fallthru
      _
    // Predicated region
    $region10: #{tpu_custom_call.1} parent=1 // pred_check
      _
    $region11: #{tpu_custom_call.1} parent=1 // pred_check_branch
      %39 = sbr.rel (0) target = $region13
    $region12: #{tpu_custom_call.1} parent=1 // pred_region
      _
    $region13: #{tpu_custom_call.1} parent=1 // pred_fallthru
      _
    // Predicated region
    $region14: #{tpu_custom_call.1} parent=1 // pred_check
      _
    $region15: #{tpu_custom_call.1} parent=1 // pred_check_branch
      %41 = sbr.rel (0) target = $region17
    $region16: #{tpu_custom_call.1} parent=1 // pred_region
      %s43 = ssub.s32 8192, 8192
      %44 = vsyncadd [#allocation7], %s43
      %s45 = sshll.u32 [#allocation8], 4
      %s46 = int_to_ptr.vmem [resolvable:$true] %s45
      %51 = dma.hbm_to_vmem [thread:$0]  %s3, 8192, %s46, [#allocation7], 256, 256, 16
    $region17: #{tpu_custom_call.1} parent=1 // pred_fallthru
      _
    // Predicated region
    $region18: #{tpu_custom_call.1} parent=1 // pred_check
      _
    $region19: #{tpu_custom_call.1} parent=1 // pred_check_branch
      %53 = sbr.rel (0) target = $region21
    $region20: #{tpu_custom_call.1} parent=1 // pred_region
      _
    $region21: #{tpu_custom_call.1} parent=1 // pred_fallthru
      _
    // Predicated region
    $region22: #{tpu_custom_call.1} parent=1 // pred_check
      _
    $region23: #{tpu_custom_call.1} parent=1 // pred_check_branch
      %55 = sbr.rel (0) target = $region25
    $region24: #{tpu_custom_call.1} parent=1 // pred_region
      _
    $region25: #{tpu_custom_call.1} parent=1 // pred_fallthru
      _
    // Predicated region
    $region26: #{tpu_custom_call.1} parent=1 // pred_check
      _
    $region27: #{tpu_custom_call.1} parent=1 // pred_check_branch
      %57 = sbr.rel (0) target = $region29
    $region28: #{tpu_custom_call.1} parent=1 // pred_region
      _
    $region29: #{tpu_custom_call.1} parent=1 // pred_fallthru
      _
    // Predicated region
    $region30: #{tpu_custom_call.1} parent=1 // pred_check
      _
    $region31: #{tpu_custom_call.1} parent=1 // pred_check_branch
      %59 = sbr.rel (0) target = $region33
    $region32: #{tpu_custom_call.1} parent=1 // pred_region
      %60 = dma.done [#allocation4], 128
    $region33: #{tpu_custom_call.1} parent=1 // pred_fallthru
      _
    // Predicated region
    $region34: #{tpu_custom_call.1} parent=1 // pred_check
      _
    $region35: #{tpu_custom_call.1} parent=1 // pred_check_branch
      %62 = sbr.rel (0) target = $region37
    $region36: #{tpu_custom_call.1} parent=1 // pred_region
      %63 = dma.done [#allocation7], 512
    $region37: #{tpu_custom_call.1} parent=1 // pred_fallthru
      _
    // Predicated region
    $region38: #{tpu_custom_call.1} parent=1 // pred_check
      _
    $region39: #{tpu_custom_call.1} parent=1 // pred_check_branch
      %65 = sbr.rel (0) target = $region41
    $region40: #{tpu_custom_call.1} parent=1 // pred_region
      %66 = dma.done [#allocation7], 8192
    $region41: #{tpu_custom_call.1} parent=1 // pred_fallthru
      _
    %v67 = vld [vmem:[#allocation6] sm:$0xff]
    %v68 = vld [vmem:[#allocation6 + $0x8] sm:$0xff]
    %v69 = vld [vmem:[#allocation6 + $0x10] sm:$0xff]
    %v70 = vld [vmem:[#allocation6 + $0x18] sm:$0xff]
    %v71 = vld [vmem:[#allocation8] sm:$0xff]
    %v72 = vld [vmem:[#allocation8 + $0x8] sm:$0xff]
    %v73 = vld [vmem:[#allocation8 + $0x10] sm:$0xff]
    %v74 = vld [vmem:[#allocation8 + $0x18] sm:$0xff]
    %v75 = vld [vmem:[#allocation8 + $0x20] sm:$0xff]
    %v76 = vld [vmem:[#allocation8 + $0x28] sm:$0xff]
    %v77 = vld [vmem:[#allocation8 + $0x30] sm:$0xff]
    %v78 = vld [vmem:[#allocation8 + $0x38] sm:$0xff]
    %v79 = vld [vmem:[#allocation8 + $0x40] sm:$0xff]
    %v80 = vld [vmem:[#allocation8 + $0x48] sm:$0xff]
    %v81 = vld [vmem:[#allocation8 + $0x50] sm:$0xff]
    %v82 = vld [vmem:[#allocation8 + $0x58] sm:$0xff]
    %v83 = vld [vmem:[#allocation8 + $0x60] sm:$0xff]
    %v84 = vld [vmem:[#allocation8 + $0x68] sm:$0xff]
    %v85 = vld [vmem:[#allocation8 + $0x70] sm:$0xff]
    %v86 = vld [vmem:[#allocation8 + $0x78] sm:$0xff]
    %v87 = vld [vmem:[#allocation8 + $0x80] sm:$0xff]
    %v88 = vld [vmem:[#allocation8 + $0x88] sm:$0xff]
    %v89 = vld [vmem:[#allocation8 + $0x90] sm:$0xff]
    %v90 = vld [vmem:[#allocation8 + $0x98] sm:$0xff]
    %v91 = vld [vmem:[#allocation8 + $0xa0] sm:$0xff]
    %v92 = vld [vmem:[#allocation8 + $0xa8] sm:$0xff]
    %v93 = vld [vmem:[#allocation8 + $0xb0] sm:$0xff]
    %v94 = vld [vmem:[#allocation8 + $0xb8] sm:$0xff]
    %v95 = vld [vmem:[#allocation8 + $0xc0] sm:$0xff]
    %v96 = vld [vmem:[#allocation8 + $0xc8] sm:$0xff]
    %v97 = vld [vmem:[#allocation8 + $0xd0] sm:$0xff]
    %v98 = vld [vmem:[#allocation8 + $0xd8] sm:$0xff]
    %v99 = vld [vmem:[#allocation8 + $0xe0] sm:$0xff]
    %v100 = vld [vmem:[#allocation8 + $0xe8] sm:$0xff]
    %v101 = vld [vmem:[#allocation8 + $0xf0] sm:$0xff]
    %v102 = vld [vmem:[#allocation8 + $0xf8] sm:$0xff]
    %v103 = vld [vmem:[#allocation8 + $0x100] sm:$0xff]
    %v104 = vld [vmem:[#allocation8 + $0x108] sm:$0xff]
    %v105 = vld [vmem:[#allocation8 + $0x110] sm:$0xff]
    %v106 = vld [vmem:[#allocation8 + $0x118] sm:$0xff]
    %v107 = vld [vmem:[#allocation8 + $0x120] sm:$0xff]
    %v108 = vld [vmem:[#allocation8 + $0x128] sm:$0xff]
    %v109 = vld [vmem:[#allocation8 + $0x130] sm:$0xff]
    %v110 = vld [vmem:[#allocation8 + $0x138] sm:$0xff]
    %v111 = vld [vmem:[#allocation8 + $0x140] sm:$0xff]
    %v112 = vld [vmem:[#allocation8 + $0x148] sm:$0xff]
    %v113 = vld [vmem:[#allocation8 + $0x150] sm:$0xff]
    %v114 = vld [vmem:[#allocation8 + $0x158] sm:$0xff]
    %v115 = vld [vmem:[#allocation8 + $0x160] sm:$0xff]
    %v116 = vld [vmem:[#allocation8 + $0x168] sm:$0xff]
    %v117 = vld [vmem:[#allocation8 + $0x170] sm:$0xff]
    %v118 = vld [vmem:[#allocation8 + $0x178] sm:$0xff]
    %v119 = vld [vmem:[#allocation8 + $0x180] sm:$0xff]
    %v120 = vld [vmem:[#allocation8 + $0x188] sm:$0xff]
    %v121 = vld [vmem:[#allocation8 + $0x190] sm:$0xff]
    %v122 = vld [vmem:[#allocation8 + $0x198] sm:$0xff]
    %v123 = vld [vmem:[#allocation8 + $0x1a0] sm:$0xff]
    %v124 = vld [vmem:[#allocation8 + $0x1a8] sm:$0xff]
    %v125 = vld [vmem:[#allocation8 + $0x1b0] sm:$0xff]
    %v126 = vld [vmem:[#allocation8 + $0x1b8] sm:$0xff]
    %v127 = vld [vmem:[#allocation8 + $0x1c0] sm:$0xff]
    %v128 = vld [vmem:[#allocation8 + $0x1c8] sm:$0xff]
    %v129 = vld [vmem:[#allocation8 + $0x1d0] sm:$0xff]
    %v130 = vld [vmem:[#allocation8 + $0x1d8] sm:$0xff]
    %v131 = vld [vmem:[#allocation8 + $0x1e0] sm:$0xff]
    %v132 = vld [vmem:[#allocation8 + $0x1e8] sm:$0xff]
    %v133 = vld [vmem:[#allocation8 + $0x1f0] sm:$0xff]
    %v134 = vld [vmem:[#allocation8 + $0x1f8] sm:$0xff]
    %v135 = vld [vmem:[#allocation3] sm:$0xff]
    %v136 = vld [vmem:[%s2] sm:$0x3]
    %v138 = vlaneseq
    %v139 = vshrl.u32 %v138, 7
    %v140 = vsub.s32 0, %v139
    %v141 = vrot.slane %v136, %v140
    %v142 = vlaneseq
    %v143 = vshrl.u32 %v142, 7
    %v144 = vsub.s32 1, %v143
    %v145 = vrot.slane %v136, %v144
    %vm148 = vcmask 130048
    %v150 = vsel %vm148, %v135, 0
    %152 = vmatprep.subr.mxu0 %v68
    %153 = vmatpush1.msra.mxu0 %v67
    %154 = vmatprep.subr.mxu0 %v70
    %155 = vmatpush1.msra.mxu0 %v69
    %156 = vmatprep.subr.mxu0 0.0
    %157 = vmatpush1.msra.mxu0 0.0
    %158 = vmatprep.subr.mxu0 0.0
    %159 = vmatpush1.msra.mxu0 0.0
    %160 = vmatprep.subr.mxu0 0.0
    %161 = vmatpush1.msra.mxu0 0.0
    %162 = vmatprep.subr.mxu0 0.0
    %163 = vmatpush1.msra.mxu0 0.0
    %164 = vmatprep.subr.mxu0 0.0
    %165 = vmatpush1.msra.mxu0 0.0
    %166 = vmatprep.subr.mxu0 0.0
    %167 = vmatpush1.msra.mxu0 0.0
    %168 = vmatprep.subr.mxu0 0.0
    %169 = vmatpush1.msra.mxu0 0.0
    %170 = vmatprep.subr.mxu0 0.0
    %171 = vmatpush1.msra.mxu0 0.0
    %172 = vmatprep.subr.mxu0 0.0
    %173 = vmatpush1.msra.mxu0 0.0
    %174 = vmatprep.subr.mxu0 0.0
    %175 = vmatpush1.msra.mxu0 0.0
    %176 = vmatprep.subr.mxu0 0.0
    %177 = vmatpush1.msra.mxu0 0.0
    %178 = vmatprep.subr.mxu0 0.0
    %179 = vmatpush1.msra.mxu0 0.0
    %180 = vmatprep.subr.mxu0 0.0
    %181 = vmatpush1.msra.mxu0 0.0
    %182 = vmatprep.subr.mxu0 0.0
    %183 = vmatpush1.msra.mxu0 0.0
    %184 = vmatprep.subr.mxu0 0.0
    %185 = vmatpush1.msra.mxu0 0.0
    %186 = vmatprep.subr.mxu0 0.0
    %187 = vmatpush1.msra.mxu0 0.0
    %188 = vmatprep.subr.mxu0 0.0
    %189 = vmatpush1.msra.mxu0 0.0
    %190 = vmatprep.subr.mxu0 0.0
    %191 = vmatpush1.msra.mxu0 0.0
    %192 = vmatprep.subr.mxu0 0.0
    %193 = vmatpush1.msra.mxu0 0.0
    %194 = vmatprep.subr.mxu0 0.0
    %195 = vmatpush1.msra.mxu0 0.0
    %196 = vmatprep.subr.mxu0 0.0
    %197 = vmatpush1.msra.mxu0 0.0
    %198 = vmatprep.subr.mxu0 0.0
    %199 = vmatpush1.msra.mxu0 0.0
    %200 = vmatprep.subr.mxu0 0.0
    %201 = vmatpush1.msra.mxu0 0.0
    %202 = vmatprep.subr.mxu0 0.0
    %203 = vmatpush1.msra.mxu0 0.0
    %204 = vmatprep.subr.mxu0 0.0
    %205 = vmatpush1.msra.mxu0 0.0
    %206 = vmatprep.subr.mxu0 0.0
    %207 = vmatpush1.msra.mxu0 0.0
    %208 = vmatprep.subr.mxu0 0.0
    %209 = vmatpush1.msra.mxu0 0.0
    %210 = vmatprep.subr.mxu0 0.0
    %211 = vmatpush1.msra.mxu0 0.0
    %212 = vmatprep.subr.mxu0 0.0
    %213 = vmatpush1.msra.mxu0 0.0
    %214 = vmatprep.subr.mxu0 0.0
    %215 = vmatpush1.msra.mxu0 0.0
    %216 = vmatprep.mubr.f32.mxu0 0.0
    %217 = vmatmul.mubr.f32.gmra.mrb[0].mxu0 %v150
    %v218 = vpop.f32.mrb[0].mxu0
    %v219 = vadd.f32 %v141, %v218
    %v220 = vpop.f32.mrb[0].mxu0
    %v221 = vadd.f32 %v145, %v220
    %222 = vdwg.mxu0
    %v223 = vmax.f32 %v219, 0.0
    %v224 = vmax.f32 %v221, 0.0
    %v225 = vld [vmem:[%s4] sm:$0x3]
    %v227 = vlaneseq
    %v228 = vshrl.u32 %v227, 7
    %v229 = vsub.s32 0, %v228
    %v230 = vrot.slane %v225, %v229
    %v231 = vlaneseq
    %v232 = vshrl.u32 %v231, 7
    %v233 = vsub.s32 1, %v232
    %v234 = vrot.slane %v225, %v233
    %237 = vmatprep.subr.mxu0 %v72
    %238 = vmatpush1.msra.mxu0 %v71
    %239 = vmatprep.subr.mxu0 %v74
    %240 = vmatpush1.msra.mxu0 %v73
    %241 = vmatprep.subr.mxu0 %v76
    %242 = vmatpush1.msra.mxu0 %v75
    %243 = vmatprep.subr.mxu0 %v78
    %244 = vmatpush1.msra.mxu0 %v77
    %245 = vmatprep.subr.mxu0 %v80
    %246 = vmatpush1.msra.mxu0 %v79
    %247 = vmatprep.subr.mxu0 %v82
    %248 = vmatpush1.msra.mxu0 %v81
    %249 = vmatprep.subr.mxu0 %v84
    %250 = vmatpush1.msra.mxu0 %v83
    %251 = vmatprep.subr.mxu0 %v86
    %252 = vmatpush1.msra.mxu0 %v85
    %253 = vmatprep.subr.mxu0 %v88
    %254 = vmatpush1.msra.mxu0 %v87
    %255 = vmatprep.subr.mxu0 %v90
    %256 = vmatpush1.msra.mxu0 %v89
    %257 = vmatprep.subr.mxu0 %v92
    %258 = vmatpush1.msra.mxu0 %v91
    %259 = vmatprep.subr.mxu0 %v94
    %260 = vmatpush1.msra.mxu0 %v93
    %261 = vmatprep.subr.mxu0 %v96
    %262 = vmatpush1.msra.mxu0 %v95
    %263 = vmatprep.subr.mxu0 %v98
    %264 = vmatpush1.msra.mxu0 %v97
    %265 = vmatprep.subr.mxu0 %v100
    %266 = vmatpush1.msra.mxu0 %v99
    %267 = vmatprep.subr.mxu0 %v102
    %268 = vmatpush1.msra.mxu0 %v101
    %269 = vmatprep.subr.mxu0 %v104
    %270 = vmatpush1.msra.mxu0 %v103
    %271 = vmatprep.subr.mxu0 %v106
    %272 = vmatpush1.msra.mxu0 %v105
    %273 = vmatprep.subr.mxu0 %v108
    %274 = vmatpush1.msra.mxu0 %v107
    %275 = vmatprep.subr.mxu0 %v110
    %276 = vmatpush1.msra.mxu0 %v109
    %277 = vmatprep.subr.mxu0 %v112
    %278 = vmatpush1.msra.mxu0 %v111
    %279 = vmatprep.subr.mxu0 %v114
    %280 = vmatpush1.msra.mxu0 %v113
    %281 = vmatprep.subr.mxu0 %v116
    %282 = vmatpush1.msra.mxu0 %v115
    %283 = vmatprep.subr.mxu0 %v118
    %284 = vmatpush1.msra.mxu0 %v117
    %285 = vmatprep.subr.mxu0 %v120
    %286 = vmatpush1.msra.mxu0 %v119
    %287 = vmatprep.subr.mxu0 %v122
    %288 = vmatpush1.msra.mxu0 %v121
    %289 = vmatprep.subr.mxu0 %v124
    %290 = vmatpush1.msra.mxu0 %v123
    %291 = vmatprep.subr.mxu0 %v126
    %292 = vmatpush1.msra.mxu0 %v125
    %293 = vmatprep.subr.mxu0 %v128
    %294 = vmatpush1.msra.mxu0 %v127
    %295 = vmatprep.subr.mxu0 %v130
    %296 = vmatpush1.msra.mxu0 %v129
    %297 = vmatprep.subr.mxu0 %v132
    %298 = vmatpush1.msra.mxu0 %v131
    %299 = vmatprep.subr.mxu0 %v134
    %300 = vmatpush1.msra.mxu0 %v133
    %301 = vmatprep.mubr.f32.mxu0 %v224
    %302 = vmatmul.mubr.f32.gmra.mrb[0].mxu0 %v223
    %v303 = vpop.f32.mrb[0].mxu0
    %v304 = vadd.f32 %v230, %v303
    %v305 = vpop.f32.mrb[0].mxu0
    %v306 = vadd.f32 %v234, %v305
    %307 = vdwg.mxu0
    %v308 = vmax.f32 %v304, 0.0
    %v309 = vmax.f32 %v306, 0.0
    %v310 = vld [vmem:[%s5] sm:$0x3]
    %v312 = vlaneseq
    %v313 = vshrl.u32 %v312, 7
    %v314 = vsub.s32 0, %v313
    %v315 = vrot.slane %v310, %v314
    %v316 = vlaneseq
    %v317 = vshrl.u32 %v316, 7
    %v318 = vsub.s32 1, %v317
    %v319 = vrot.slane %v310, %v318
    %v322 = vmul.f32 %v308, %v315
    %v323 = vmul.f32 %v309, %v319
    %v324 = vadd.f32 %v322, %v323
    %325 = vadd.xlane.f32.xlu0 %v324
    %v326 = vpop.xlane.xlu0 %325
    %s327 = sld [smem:[#allocation2]]
    %v328 = vstv %s327
    %v329 = vadd.f32 %v326, %v328
    %v331 = vlaneseq
    %v332 = vand.u32 %v331, 127
    %v333 = vlaneseq
    %v334 = vshrl.u32 %v333, 7
    %v335 = vsub.s32 %v332, %v334
    %v336 = vrot.slane %v329, %v335
    %vm338 = vcmask 57344
    %339 = vst.msk [vmem:[#allocation9] sm:$0x1] %vm338, %v336
    // Predicated region
    $region42: #{tpu_custom_call.1} parent=1 // pred_check
      _
    $region43: #{tpu_custom_call.1} parent=1 // pred_check_branch
      %341 = sbr.rel (0) target = $region45
    $region44: #{tpu_custom_call.1} parent=1 // pred_region
      %s343 = ssub.s32 16, 16
      %344 = vsyncadd [#allocation5], %s343
      %s346 = sshll.u32 [#allocation9], 4
      %s347 = int_to_ptr.vmem [resolvable:$true] %s346
      %349 = dma.vmem_to_hbm [thread:$0]  %s347, 16, %s7, [#allocation5]
    $region45: #{tpu_custom_call.1} parent=1 // pred_fallthru
      _
    // Predicated region
    $region46: #{tpu_custom_call.1} parent=1 // pred_check
      _
    $region47: #{tpu_custom_call.1} parent=1 // pred_check_branch
      %351 = sbr.rel (0) target = $region49
    $region48: #{tpu_custom_call.1} parent=1 // pred_region
      %352 = dma.done [#allocation5], 16
    $region49: #{tpu_custom_call.1} parent=1 // pred_fallthru
      _
    %353 = vsyncpa [#allocation4], 1
    %354 = vsyncpa [#allocation7], 1
    %355 = vsyncpa [#allocation5], 1

</llo_original>
